<compile_context>
chip_gen: v5e
topology: v5e:2x2
jax: 0.10.0
libtpu: 0.0.40
codegen_flags: <defaults>
</compile_context>

<pallas_src>
import jax
import jax.numpy as jnp
from jax import lax
from jax.experimental import pallas as pl
from jax.experimental.pallas import tpu as pltpu


def _round_up(x, m):
    return (x + m - 1) // m * m


# --------------------------------------------------------------------------
# Kernel 1: tiled matmul + bias (bf16 operands, f32 accumulation on the MXU)
#   grid = (M//tm, N//tn, K//tk); accumulator in VMEM scratch; bias added and
#   stored on the last K step.
# --------------------------------------------------------------------------
def matmul_bias_kernel(x_ref, w_ref, b_ref, o_ref, acc_ref):
    k = pl.program_id(2)

    @pl.when(k == 0)
    def _():
        acc_ref[...] = jnp.zeros(acc_ref.shape, jnp.float32)

    acc_ref[...] += jnp.dot(x_ref[...], w_ref[...],
                            preferred_element_type=jnp.float32)

    @pl.when(k == pl.num_programs(2) - 1)
    def _():
        o_ref[...] = (acc_ref[...] + b_ref[...]).astype(o_ref.dtype)


def matmul_bias(x, w, b, *, tm=None, tn=128, tk=512):
    """(M, K) @ (K, N) + (1, N) -> (M, N) f32.  bf16 operands, f32 accumulate.

    Production tile guidance (per perf review): tm/tn around 256-512 on v6e
    (128 MiB VMEM), ~half that footprint on v7x (64 MiB VMEM per TC).
    """
    m, k = x.shape
    k2, n = w.shape
    assert k == k2
    tm = m if tm is None else min(tm, m)
    tn = min(tn, n)
    tk = min(tk, k)
    assert m % tm == 0 and n % tn == 0 and k % tk == 0
    grid = (m // tm, n // tn, k // tk)
    return pl.pallas_call(
        matmul_bias_kernel,
        out_shape=jax.ShapeDtypeStruct((m, n), jnp.float32),
        grid_spec=pltpu.PrefetchScalarGridSpec(
            num_scalar_prefetch=0,
            grid=grid,
            in_specs=[pl.BlockSpec((tm, tk), lambda i, j, kk: (i, kk)),
                      pl.BlockSpec((tk, tn), lambda i, j, kk: (kk, j)),
                      pl.BlockSpec((1, tn), lambda i, j, kk: (0, j))],
            out_specs=pl.BlockSpec((tm, tn), lambda i, j, kk: (i, j)),
            scratch_shapes=[pltpu.VMEM((tm, tn), jnp.float32)]),
        compiler_params=pltpu.CompilerParams(
            dimension_semantics=("parallel", "parallel", "arbitrary"),
            vmem_limit_bytes=48 * 1024 * 1024),
        cost_estimate=pl.CostEstimate(
            flops=2 * m * n * k,
            transcendentals=0,
            bytes_accessed=2 * m * k + 2 * k * n + 4 * n + 4 * m * n),
    )(x.astype(jnp.bfloat16), w.astype(jnp.bfloat16), b.astype(jnp.float32))


# --------------------------------------------------------------------------
# Kernel 2: FUSED LM head + shifted cross-entropy.
#   hidden (Npad, Hp) bf16  @  w_lm (Hp, V) bf16  + b_lm (1, V) f32
#   -> per-row loss (Npad, 1) f32, logits never touch HBM.
#   grid = (Npad//tm, V//tn); per-row running max / sum-exp / picked-logit
#   live in (tm, 1) VMEM scratch; finalize on the last vocab tile.
#   Rows whose label is < 0 (padding / ignore_index-style) or >= V contribute 0.
# --------------------------------------------------------------------------
def lmhead_ce_kernel(hid_ref, w_ref, b_ref, lbl_ref, loss_ref,
                     m_sc, l_sc, p_sc):
    j = pl.program_id(1)
    nj = pl.num_programs(1)
    tn = b_ref.shape[-1]

    @pl.when(j == 0)
    def _():
        m_sc[...] = jnp.full(m_sc.shape, -jnp.inf, jnp.float32)
        l_sc[...] = jnp.zeros(l_sc.shape, jnp.float32)
        p_sc[...] = jnp.zeros(p_sc.shape, jnp.float32)

    # (tm, tn) f32 logits tile for this vocab slice (bf16 inputs, f32 acc).
    logits = jnp.dot(hid_ref[...], w_ref[...],
                     preferred_element_type=jnp.float32) + b_ref[...]
    labels = lbl_ref[...]                                   # (tm, 1) int32

    # label pick restricted to this vocab tile
    col = lax.broadcasted_iota(jnp.int32, logits.shape, 1) + j * tn
    p_sc[...] += jnp.sum(jnp.where(col == labels, logits, 0.0),
                         axis=-1, keepdims=True)

    # online logsumexp update
    m_new = jnp.maximum(m_sc[...], jnp.max(logits, axis=-1, keepdims=True))
    alpha = jnp.exp(m_sc[...] - m_new)
    l_sc[...] = alpha * l_sc[...] + jnp.sum(jnp.exp(logits - m_new),
                                            axis=-1, keepdims=True)
    m_sc[...] = m_new

    @pl.when(j == nj - 1)
    def _():
        lse = m_sc[...] + jnp.log(l_sc[...])
        valid = (labels >= 0) & (labels < nj * tn)
        loss_ref[...] = jnp.where(valid, lse - p_sc[...], 0.0)


def fused_lm_head_ce(hidden2d, w_lm, b_lm, labels, *, tm=None, tn=128):
    """Mean CE(hidden2d @ w_lm + b_lm, labels) without materializing logits.

    `tn` (vocab tile) default 128; raise toward 512 on v6e / 256 on v7x for
    production vocab sizes.  Negative labels are ignored (ignore_index-style).
    """
    n_rows, hp = hidden2d.shape
    v = w_lm.shape[1]
    tn = min(tn, v)
    assert v % tn == 0
    if tm is None:
        tm = min(128, _round_up(n_rows, 8))
    n_pad = _round_up(n_rows, tm)

    hid = jnp.pad(hidden2d, ((0, n_pad - n_rows), (0, 0))).astype(jnp.bfloat16)
    lbl = jnp.pad(labels.astype(jnp.int32), (0, n_pad - n_rows),
                  constant_values=-1).reshape(n_pad, 1)

    grid = (n_pad // tm, v // tn)
    row_losses = pl.pallas_call(
        lmhead_ce_kernel,
        out_shape=jax.ShapeDtypeStruct((n_pad, 1), jnp.float32),
        grid_spec=pltpu.PrefetchScalarGridSpec(
            num_scalar_prefetch=0,
            grid=grid,
            in_specs=[pl.BlockSpec((tm, hp), lambda i, j: (i, 0)),
                      pl.BlockSpec((hp, tn), lambda i, j: (0, j)),
                      pl.BlockSpec((1, tn), lambda i, j: (0, j)),
                      pl.BlockSpec((tm, 1), lambda i, j: (i, 0))],
            out_specs=pl.BlockSpec((tm, 1), lambda i, j: (i, 0)),
            scratch_shapes=[pltpu.VMEM((tm, 1), jnp.float32),
                            pltpu.VMEM((tm, 1), jnp.float32),
                            pltpu.VMEM((tm, 1), jnp.float32)]),
        compiler_params=pltpu.CompilerParams(
            dimension_semantics=("parallel", "arbitrary"),
            vmem_limit_bytes=48 * 1024 * 1024),
        cost_estimate=pl.CostEstimate(
            flops=2 * n_pad * hp * v + 6 * n_pad * v,
            transcendentals=n_pad * v,
            bytes_accessed=2 * n_pad * hp + 2 * hp * v + 4 * v
                           + 4 * n_pad + 4 * n_pad),
    )(hid, w_lm.astype(jnp.bfloat16), b_lm.astype(jnp.float32), lbl)

    valid = (labels >= 0) & (labels < v)
    denom = jnp.maximum(jnp.sum(valid.astype(jnp.float32)), 1.0)
    return jnp.sum(row_losses) / denom


# --------------------------------------------------------------------------
# Box conversion xyxy -> cxcywh normalized by (w, h): plain jnp.
# (A (N, 4) affine transform is far below one vreg; a pallas_call here is
#  pure overhead -- see perf review.)
# --------------------------------------------------------------------------
def boxes_xyxy_to_cxcywh_norm(boxes_xyxy, img_h, img_w):
    b = boxes_xyxy.astype(jnp.float32)
    cx = (b[:, 0] + b[:, 2]) * 0.5 / img_w
    cy = (b[:, 1] + b[:, 3]) * 0.5 / img_h
    bw = (b[:, 2] - b[:, 0]) / img_w
    bh = (b[:, 3] - b[:, 1]) / img_h
    return jnp.stack([cx, cy, bw, bh], axis=-1)


# --------------------------------------------------------------------------
# "LDSModel" forward (synthetic weights; heavy compute in Pallas kernels)
# --------------------------------------------------------------------------
class LDSModelPallas:
    def __init__(self, vocab=256, hidden=32, img_feat_dim=4 * 16 * 16):
        k = jax.random.PRNGKey(42)
        k1, k2, k3, k4 = jax.random.split(k, 4)
        self.vocab = vocab
        self.hidden = hidden
        # hidden dim padded to a lane/MXU-friendly multiple of 128; the zero
        # padding contributes nothing to any dot product.
        self.hp = max(128, _round_up(hidden, 128))

        embed = 0.02 * jax.random.normal(k1, (vocab, hidden), jnp.float32)
        w_img = 0.02 * jax.random.normal(k2, (img_feat_dim, hidden), jnp.float32)
        w_lm = 0.02 * jax.random.normal(k3, (hidden, vocab), jnp.float32)
        b_lm = 0.01 * jax.random.normal(k4, (1, vocab), jnp.float32)

        pad_h = self.hp - hidden
        # matmul operands stored bf16 (MXU-native on v5e/v6e/v7x); biases f32.
        self.embed = jnp.pad(embed, ((0, 0), (0, pad_h))).astype(jnp.bfloat16)
        self.w_img = jnp.pad(w_img, ((0, 0), (0, pad_h))).astype(jnp.bfloat16)
        self.b_img = jnp.zeros((1, self.hp), jnp.float32)
        self.w_lm = jnp.pad(w_lm, ((0, pad_h), (0, 0))).astype(jnp.bfloat16)
        self.b_lm = b_lm.astype(jnp.float32)

    def forward(self, image_clip, input_ids, image_source, image_det,
                ground_truth_boxes=None, ground_truth_phrases=None,
                ground_truth_text=None):
        losses = {}

        if ground_truth_text is not None:
            b, s = input_ids.shape
            # glue: embedding lookup (gather). XLA fuses the gather with the
            # broadcast-add of the image features into one pass over (B,S,Hp),
            # so no extra HBM round trip for `hidden` is introduced here.
            tok_h = jnp.take(self.embed, input_ids, axis=0).astype(jnp.float32)

            # image projection via tiled Pallas matmul (bf16 ops, f32 acc)
            img_flat = image_clip.reshape(b, -1)
            img_h = matmul_bias(img_flat, self.w_img, self.b_img)   # (B, Hp) f32
            hidden = tok_h + img_h[:, None, :]                      # (B, S, Hp)

            # shifted next-token CE: only positions :-1 feed the LM head, and
            # the LM-head matmul + logsumexp + label pick are fused in one
            # pallas_call -- logits are never written to HBM.
            hid2d = hidden[:, :-1, :].reshape(b * (s - 1), self.hp)
            labels = input_ids[:, 1:].reshape(-1).astype(jnp.int32)
            losses['llava_loss'] = fused_lm_head_ce(hid2d, self.w_lm,
                                                    self.b_lm, labels)
            # TODO(synk): llava_model.generate + tokenizer.batch_decode + regex
            # text parsing (autoregressive decode / string ops) have no Pallas
            # equivalent; skipped.

        if ground_truth_boxes is not None and ground_truth_phrases is not None:
            h, w = image_source.shape[:2]
            target_boxes = boxes_xyxy_to_cxcywh_norm(ground_truth_boxes, h, w)
            losses['target_boxes_cxcywh_norm'] = target_boxes
            # TODO(synk): GroundingDINO forward + compute_loss (DETR-style
            # detector with Hungarian matching) is untranslatable here.

        return losses


# --------------------------------------------------------------------------
if __name__ == "__main__":
    key = jax.random.PRNGKey(0)
    k1, k2, k3, k4 = jax.random.split(key, 4)

    B, C, HW, S = 2, 4, 16, 8
    VOCAB = 256

    image_clip = jax.random.normal(k1, (B, C, HW, HW), jnp.float32)   # NCHW
    input_ids = jax.random.randint(k2, (B, S), 0, VOCAB, jnp.int32)
    image_source = jax.random.uniform(k3, (HW, HW, 3), jnp.float32)   # HWC (shape only)
    image_det = jax.random.normal(k4, (B, C, HW, HW), jnp.float32)    # unused (see TODO)
    gt_boxes = jnp.array([[1.0, 2.0, 9.0, 12.0],
                          [0.0, 0.0, 16.0, 16.0],
                          [3.0, 4.0, 8.0, 10.0]], jnp.float32)

    model = LDSModelPallas(vocab=VOCAB, hidden=32, img_feat_dim=C * HW * HW)
    losses = model.forward(image_clip, input_ids, image_source, image_det,
                           ground_truth_boxes=gt_boxes,
                           ground_truth_phrases=["obj_a", "obj_b", "obj_c"],
                           ground_truth_text="a photo of objects [DET]")
    jax.block_until_ready(losses)

    # ---- correctness check against plain-JAX reference (same bf16 operands,
    # f32 accumulation, so numerics match the kernels up to summation order) --
    embed_f = model.embed.astype(jnp.float32)
    w_img_f = model.w_img.astype(jnp.float32)
    w_lm_f = model.w_lm.astype(jnp.float32)

    tok_h = jnp.take(embed_f, input_ids, axis=0)
    img_f = image_clip.reshape(B, -1).astype(jnp.bfloat16).astype(jnp.float32)
    img_h = img_f @ w_img_f + model.b_img
    hidden = tok_h + img_h[:, None, :]
    hid2d = hidden[:, :-1, :].reshape(-1, model.hp)
    hid_bf = hid2d.astype(jnp.bfloat16).astype(jnp.float32)
    logits_ref = hid_bf @ w_lm_f + model.b_lm
    lb = input_ids[:, 1:].reshape(-1)
    ce_ref = jnp.mean(jax.nn.logsumexp(logits_ref, axis=-1)
                      - logits_ref[jnp.arange(logits_ref.shape[0]), lb])
    assert jnp.allclose(losses['llava_loss'], ce_ref, rtol=2e-3, atol=2e-3), \
        (losses['llava_loss'], ce_ref)

    h, w = image_source.shape[:2]
    cx = (gt_boxes[:, 0] + gt_boxes[:, 2]) / 2 / w
    cy = (gt_boxes[:, 1] + gt_boxes[:, 3]) / 2 / h
    bw = (gt_boxes[:, 2] - gt_boxes[:, 0]) / w
    bh = (gt_boxes[:, 3] - gt_boxes[:, 1]) / h
    boxes_ref = jnp.stack([cx, cy, bw, bh], axis=-1)
    assert jnp.allclose(losses['target_boxes_cxcywh_norm'], boxes_ref,
                        rtol=1e-5, atol=1e-5)

    print("KERNEL_OK")
</pallas_src>

<mosaic_0001>
module attributes {stable_mosaic.version = 11 : i64} {
  func.func @matmul_bias_kernel(%arg0: i32, %arg1: i32, %arg2: i32, %arg3: memref<2x512xbf16, #tpu.memory_space<vmem>>, %arg4: memref<512x128xbf16, #tpu.memory_space<vmem>>, %arg5: memref<1x128xf32, #tpu.memory_space<vmem>>, %arg6: memref<2x128xf32, #tpu.memory_space<vmem>>, %arg7: memref<2x128xf32, #tpu.memory_space<vmem>>) attributes {dimension_semantics = [#tpu.dimension_semantics<parallel>, #tpu.dimension_semantics<parallel>, #tpu.dimension_semantics<arbitrary>], iteration_bounds = array<i64: 1, 1, 2>, scalar_prefetch = 0 : i64, scratch_operands = 1 : i64, tpu.core_type = #tpu.core_type<tc>, window_params = [{transform_indices = @transform_0, window_bounds = array<i64: 2, 512>}, {transform_indices = @transform_1, window_bounds = array<i64: 512, 128>}, {transform_indices = @transform_2, window_bounds = array<i64: 1, 128>}, {transform_indices = @transform_3, window_bounds = array<i64: 2, 128>}]} {
    %c0_i32 = arith.constant 0 : i32
    %0 = arith.cmpi eq, %arg2, %c0_i32 : i32
    %1 = arith.extui %0 : i1 to i32
    %c0_i32_0 = arith.constant 0 : i32
    %2 = arith.cmpi ne, %1, %c0_i32_0 : i32
    scf.if %2 {
      %cst_9 = arith.constant 0.000000e+00 : f32
      %12 = vector.broadcast %cst_9 : f32 to vector<2x128xf32>
      %c0_10 = arith.constant 0 : index
      %c0_11 = arith.constant 0 : index
      %13 = vector.load %arg7[%c0_10, %c0_11] : memref<2x128xf32, #tpu.memory_space<vmem>>, vector<2x128xf32>
      tpu.vector_store %arg7[%c0_10, %c0_11], %12 {strides = array<i32>} : memref<2x128xf32, #tpu.memory_space<vmem>>, vector<2x128xf32>,
    } else {
    }
    %c0 = arith.constant 0 : index
    %c0_1 = arith.constant 0 : index
    %3 = vector.load %arg7[%c0, %c0_1] : memref<2x128xf32, #tpu.memory_space<vmem>>, vector<2x128xf32>
    %c0_2 = arith.constant 0 : index
    %c0_3 = arith.constant 0 : index
    %4 = vector.load %arg3[%c0_2, %c0_3] : memref<2x512xbf16, #tpu.memory_space<vmem>>, vector<2x512xbf16>
    %c0_4 = arith.constant 0 : index
    %c0_5 = arith.constant 0 : index
    %5 = vector.load %arg4[%c0_4, %c0_5] : memref<512x128xbf16, #tpu.memory_space<vmem>>, vector<512x128xbf16>
    %cst = arith.constant dense<0.000000e+00> : vector<2x128xf32>
    %6 = tpu.matmul %4, %5, %cst {dimension_numbers = #tpu.dot_dimension_numbers<[1], [0], [0], [1], [0, 0, 1, 1], [], []>} : vector<2x512xbf16>, vector<512x128xbf16>, vector<2x128xf32> -> vector<2x128xf32>
    %7 = arith.addf %3, %6 : vector<2x128xf32>
    %c0_6 = arith.constant 0 : index
    %c0_7 = arith.constant 0 : index
    %8 = vector.load %arg7[%c0_6, %c0_7] : memref<2x128xf32, #tpu.memory_space<vmem>>, vector<2x128xf32>
    tpu.vector_store %arg7[%c0_6, %c0_7], %7 {strides = array<i32>} : memref<2x128xf32, #tpu.memory_space<vmem>>, vector<2x128xf32>,
    %c1_i32 = arith.constant 1 : i32
    %9 = arith.cmpi eq, %arg2, %c1_i32 : i32
    %10 = arith.extui %9 : i1 to i32
    %c0_i32_8 = arith.constant 0 : i32
    %11 = arith.cmpi ne, %10, %c0_i32_8 : i32
    scf.if %11 {
      %c0_9 = arith.constant 0 : index
      %c0_10 = arith.constant 0 : index
      %12 = vector.load %arg7[%c0_9, %c0_10] : memref<2x128xf32, #tpu.memory_space<vmem>>, vector<2x128xf32>
      %c0_11 = arith.constant 0 : index
      %c0_12 = arith.constant 0 : index
      %13 = vector.load %arg5[%c0_11, %c0_12] : memref<1x128xf32, #tpu.memory_space<vmem>>, vector<1x128xf32>
      %14 = vector.broadcast %13 : vector<1x128xf32> to vector<2x128xf32>
      %15 = arith.addf %12, %14 : vector<2x128xf32>
      %c0_13 = arith.constant 0 : index
      %c0_14 = arith.constant 0 : index
      %16 = vector.load %arg6[%c0_13, %c0_14] : memref<2x128xf32, #tpu.memory_space<vmem>>, vector<2x128xf32>
      tpu.vector_store %arg6[%c0_13, %c0_14], %15 {strides = array<i32>} : memref<2x128xf32, #tpu.memory_space<vmem>>, vector<2x128xf32>,
    } else {
    }
    return
  }
  func.func @transform_0(%arg0: i32, %arg1: i32, %arg2: i32) -> (i32, i32) {
    %c0_i32 = arith.constant 0 : i32
    return %arg0, %arg2 : i32, i32
  }
  func.func @transform_1(%arg0: i32, %arg1: i32, %arg2: i32) -> (i32, i32) {
    %c0_i32 = arith.constant 0 : i32
    return %arg2, %arg1 : i32, i32
  }
  func.func @transform_2(%arg0: i32, %arg1: i32, %arg2: i32) -> (i32, i32) {
    %c0_i32 = arith.constant 0 : i32
    %c0_i32_0 = arith.constant 0 : i32
    return %c0_i32, %arg1 : i32, i32
  }
  func.func @transform_3(%arg0: i32, %arg1: i32, %arg2: i32) -> (i32, i32) {
    %c0_i32 = arith.constant 0 : i32
    return %arg0, %arg1 : i32, i32
  }
}

</mosaic_0001>

<llo_original>
// kernel: tpu_custom_call.1
$region0: #{tpu_custom_call.1}
  #allocation0 [shape = 'u32[]', space=smem, size = 0x4, offset = 0x4, fixed_abs, tag = 'smem constant byte address 0x4 - core index']
  #allocation1 [shape = 'u32[72,128]{1,0:T(1,128)}', space=vmem, size = 0x9000, scoped, tag = 'internal scratch']
  #allocation2 [shape = 'f32[2,128]{1,0:T(2,128)}', space=vmem, size = 0x400, scoped, tag = 'scratch operand']
  %s0 = inlined_call_operand.hbm [shape: bf16[2,1024], index: 0, kind: input, shape index: {}]
  %s1 = inlined_call_operand.hbm [shape: bf16[1024,128], index: 1, kind: input, shape index: {}]
  %s2 = inlined_call_operand.vmem [shape: f32[1,128], index: 2, kind: input, shape index: {}]
  %s3 = inlined_call_operand.hbm [shape: f32[2,128], index: 3, kind: output, shape index: {}]
  %s4 = sld [smem:[#allocation0]]
  $region61: #{tpu_custom_call.1} parent=0
    _
  %s6 = ssub.s32 1, %s4
  %s7 = scalar_select 0, %s6, %s4
  $region1: #{tpu_custom_call.1} parent=0
    #allocation3 [shape = 'u8[4096]{0}', space=vmem, size = 0x1000, scoped, tag = 'input window, operand 0']
    #allocation4 [shape = 's32[2]{0}', space=sflag, size = 0x8, scoped, tag = 'scoped memory for tpu_custom_call.1']
    #allocation5 [shape = 's32[2]{0}', space=sflag, size = 0x8, scoped, tag = 'scoped memory for tpu_custom_call.1']
    #allocation6 [shape = 'u8[262144]{0}', space=vmem, size = 0x40000, scoped, tag = 'input window, operand 1']
    #allocation7 [shape = 's32[2]{0}', space=sflag, size = 0x8, scoped, tag = 'scoped memory for tpu_custom_call.1']
    #allocation8 [shape = 'u8[1024]{0}', space=vmem, size = 0x400, scoped, tag = 'output window, operand 0, single buffered']
    %8 = vsyncpa [#allocation4], 0
    %s9 = scalar_lea.sflag [#allocation4], 1
    %10 = vsyncpa %s9, 0
    %11 = vsyncpa [#allocation7], 0
    %s12 = scalar_lea.sflag [#allocation7], 1
    %13 = vsyncpa %s12, 0
    %14 = vsyncpa [#allocation5], 0
    loop: start=0, step=1, limit=4
    $region2: #{tpu_custom_call.1} parent=1 // loop_pre_header
      _
    $region3: #{tpu_custom_call.1} parent=1 // loop_header
      %s16 = sphi 0, %s20
      %p17 = scmp.ge.s32.totalorder %s16, 4
      %s23 = sphi 0, %s42
      %s24 = sphi 0, %s38
      %s25 = sphi 0, %s34
      %s26 = sphi 0, %s23
      %s27 = sphi 0, %s24
      %s28 = sphi 0, %s25
      %s29 = sphi 0, %s26
      %s30 = sphi 0, %s27
      %s31 = sphi 0, %s28
      %s47 = sphi 0, %s49
      %s50 = sphi 0, %s47
      %s51 = sphi 0, %s50
      %s67 = sphi 0, %s51
      %s75 = sphi 0, %s77
      %s78 = sphi 0, %s75
      %s79 = sphi 0, %s78
      %s95 = sphi 0, %s79
      %s101 = sphi 0, %s103
      %s104 = sphi 0, %s101
      %s105 = sphi 0, %s104
      %s121 = sphi 0, %s105
      %s129 = sphi 0, %s131
      %s132 = sphi 0, %s129
      %s133 = sphi 0, %s132
      %s149 = sphi 0, %s133
    $region4: #{tpu_custom_call.1} parent=1 // loop_header_branch
      %19 = sbr.rel (%p17) target = $region8
    $region5: #{tpu_custom_call.1} parent=1 // loop_body
      %s21 = ssub.s32 %s16, 1
      %s22 = ssub.s32 %s16, 2
      %s32 = sadd.s32 1, %s25
      %p33 = scmp.ge.s32.totalorder %s32, 2
      %s34 = scalar_select %p33, 0, %s32
      %s35 = sadd.s32 1, %s24
      %s36 = scalar_select %p33, %s35, %s24
      %p37 = scmp.ge.s32.totalorder %s36, 1
      %s38 = scalar_select %p37, 0, %s36
      %s39 = sadd.s32 1, %s23
      %s40 = scalar_select %p37, %s39, %s23
      %p41 = scmp.ge.s32.totalorder %s40, 1
      %s42 = scalar_select %p41, 0, %s40
      %s43 = ssub.s32 %s23, %s42
      %s44 = ssub.s32 %s25, %s34
      %s45 = sor.u32 %s43, %s44
      %p46 = scmp.eq.s32.totalorder %s45, 0
      %s48 = sadd.s32 %s47, 1
      %s49 = scalar_select %p46, %s47, %s48
      %p52 = pneg %p46
      %p53 = scmp.eq.s32.totalorder %s16, 1
      %p54 = por %p52, %p53
      %p55 = scmp.ne.s32.totalorder %s47, %s50
      %p56 = scmp.eq.s32.totalorder %s16, 0
      %p57 = por %p55, %p56
      %p58 = scmp.ne.s32.totalorder %s47, %s50
      %p59 = scmp.eq.s32.totalorder %s21, 1
      %p60 = por %p58, %p59
      %p61 = scmp.ne.s32.totalorder %s50, %s51
      %p62 = scmp.eq.s32.totalorder %s21, 0
      %p63 = por %p61, %p62
      %p64 = scmp.ne.s32.totalorder %s50, %s51
      %p65 = scmp.eq.s32.totalorder %s22, 1
      %p66 = por %p64, %p65
      %p68 = scmp.ne.s32.totalorder %s51, %s67
      %p69 = scmp.eq.s32.totalorder %s22, 0
      %p70 = por %p68, %p69
      %s71 = ssub.s32 %s25, %s34
      %s72 = ssub.s32 %s24, %s38
      %s73 = sor.u32 %s71, %s72
      %p74 = scmp.eq.s32.totalorder %s73, 0
      %s76 = sadd.s32 %s75, 1
      %s77 = scalar_select %p74, %s75, %s76
      %p80 = pneg %p74
      %p81 = scmp.eq.s32.totalorder %s16, 1
      %p82 = por %p80, %p81
      %p83 = scmp.ne.s32.totalorder %s75, %s78
      %p84 = scmp.eq.s32.totalorder %s16, 0
      %p85 = por %p83, %p84
      %p86 = scmp.ne.s32.totalorder %s75, %s78
      %p87 = scmp.eq.s32.totalorder %s21, 1
      %p88 = por %p86, %p87
      %p89 = scmp.ne.s32.totalorder %s78, %s79
      %p90 = scmp.eq.s32.totalorder %s21, 0
      %p91 = por %p89, %p90
      %p92 = scmp.ne.s32.totalorder %s78, %s79
      %p93 = scmp.eq.s32.totalorder %s22, 1
      %p94 = por %p92, %p93
      %p96 = scmp.ne.s32.totalorder %s79, %s95
      %p97 = scmp.eq.s32.totalorder %s22, 0
      %p98 = por %p96, %p97
      %s99 = ssub.s32 %s24, %s38
      %p100 = scmp.eq.s32.totalorder %s99, 0
      %s102 = sadd.s32 %s101, 1
      %s103 = scalar_select %p100, %s101, %s102
      %p106 = pneg %p100
      %p107 = scmp.eq.s32.totalorder %s16, 1
      %p108 = por %p106, %p107
      %p109 = scmp.ne.s32.totalorder %s101, %s104
      %p110 = scmp.eq.s32.totalorder %s16, 0
      %p111 = por %p109, %p110
      %p112 = scmp.ne.s32.totalorder %s101, %s104
      %p113 = scmp.eq.s32.totalorder %s21, 1
      %p114 = por %p112, %p113
      %p115 = scmp.ne.s32.totalorder %s104, %s105
      %p116 = scmp.eq.s32.totalorder %s21, 0
      %p117 = por %p115, %p116
      %p118 = scmp.ne.s32.totalorder %s104, %s105
      %p119 = scmp.eq.s32.totalorder %s22, 1
      %p120 = por %p118, %p119
      %p122 = scmp.ne.s32.totalorder %s105, %s121
      %p123 = scmp.eq.s32.totalorder %s22, 0
      %p124 = por %p122, %p123
      %s125 = ssub.s32 %s23, %s42
      %s126 = ssub.s32 %s24, %s38
      %s127 = sor.u32 %s125, %s126
      %p128 = scmp.eq.s32.totalorder %s127, 0
      %s130 = sadd.s32 %s129, 1
      %s131 = scalar_select %p128, %s129, %s130
      %p134 = pneg %p128
      %p135 = scmp.eq.s32.totalorder %s16, 1
      %p136 = por %p134, %p135
      %p137 = scmp.ne.s32.totalorder %s129, %s132
      %p138 = scmp.eq.s32.totalorder %s16, 0
      %p139 = por %p137, %p138
      %p140 = scmp.ne.s32.totalorder %s129, %s132
      %p141 = scmp.eq.s32.totalorder %s21, 1
      %p142 = por %p140, %p141
      %p143 = scmp.ne.s32.totalorder %s132, %s133
      %p144 = scmp.eq.s32.totalorder %s21, 0
      %p145 = por %p143, %p144
      %p146 = scmp.ne.s32.totalorder %s132, %s133
      %p147 = scmp.eq.s32.totalorder %s22, 1
      %p148 = por %p146, %p147
      %p150 = scmp.ne.s32.totalorder %s133, %s149
      %p151 = scmp.eq.s32.totalorder %s22, 0
      %p152 = por %p150, %p151
      %p153 = scmp.le.s32.totalorder 1, %s16
      %p154 = scmp.lt.s32.totalorder %s16, 3
      %p155 = pnand %p153, %p154
      %p156 = pneg %p155
      // Predicated region
      $region9: #{tpu_custom_call.1} parent=5 // pred_check
        _
      $region10: #{tpu_custom_call.1} parent=5 // pred_check_branch
        %158 = sbr.rel (%p155) target = $region12
      $region11: #{tpu_custom_call.1} parent=5 // pred_region
        %s159 = ssub.s32 %s16, 1
        // Predicated region
        $region13: #{tpu_custom_call.1} parent=11 // pred_check
          %p160 = pneg %p117
        $region14: #{tpu_custom_call.1} parent=11 // pred_check_branch
          %162 = sbr.rel (%p160) target = $region16
        $region15: #{tpu_custom_call.1} parent=11 // pred_region
          %p163 = scmp.lt.s32.totalorder %s27, 0
          %s164 = scalar_select %p163, %s27, 0
          %s165 = scalar_lea.vmem %s2, %s164
        $region16: #{tpu_custom_call.1} parent=11 // pred_fallthru
          _
      $region12: #{tpu_custom_call.1} parent=5 // pred_fallthru
        _
      %p166 = scmp.lt.s32.totalorder %s16, 2
      // Predicated region
      $region17: #{tpu_custom_call.1} parent=5 // pred_check
        %p167 = pneg %p166
      $region18: #{tpu_custom_call.1} parent=5 // pred_check_branch
        %169 = sbr.rel (%p167) target = $region20
      $region19: #{tpu_custom_call.1} parent=5 // pred_region
        // Predicated region
        $region21: #{tpu_custom_call.1} parent=19 // pred_check
          %p170 = pneg %p57
        $region22: #{tpu_custom_call.1} parent=19 // pred_check_branch
          %172 = sbr.rel (%p170) target = $region24
        $region23: #{tpu_custom_call.1} parent=19 // pred_region
          %s173 = sand.u32 %s47, 1
          %s174 = scalar_lea.sflag [#allocation4], %s173
          %s175 = sand.u32 %s47, 1
          %s176 = smul.addr %s175, 4
          %s177 = scalar_lea.vmem [#allocation3], %s176
          %s178 = smul.u32 4, %s25
          %180 = vsyncadd %s174, 0
          %s181 = smul.addr %s23, 8
          %s182 = sadd.s32 %s178, %s181
          %s183 = scalar_lea.hbm %s0, %s182
          %s185 = sshll.u32 %s183, 4
          %s186 = int_to_ptr.hbm [resolvable:$true] %s185
          %s187 = sshll.u32 %s177, 4
          %s188 = int_to_ptr.vmem [resolvable:$true] %s187
          %190 = dma.hbm_to_vmem [thread:$0]  %s186, 64, %s188, %s174
        $region24: #{tpu_custom_call.1} parent=19 // pred_fallthru
          _
        // Predicated region
        $region25: #{tpu_custom_call.1} parent=19 // pred_check
          %p191 = pneg %p85
        $region26: #{tpu_custom_call.1} parent=19 // pred_check_branch
          %193 = sbr.rel (%p191) target = $region28
        $region27: #{tpu_custom_call.1} parent=19 // pred_region
          %s194 = sand.u32 %s75, 1
          %s195 = scalar_lea.sflag [#allocation7], %s194
          %s196 = sand.u32 %s75, 1
          %s197 = smul.addr %s196, 256
          %s198 = scalar_lea.vmem [#allocation6], %s197
          %s199 = smul.u32 64, %s25
          %201 = vsyncadd %s195, 0
          %s202 = sadd.s32 %s24, %s199
          %s203 = smul.addr %s202, 4
          %s204 = scalar_lea.hbm %s1, %s203
          %s205 = sshll.u32 %s204, 4
          %s206 = int_to_ptr.hbm [resolvable:$true] %s205
          %s207 = sshll.u32 %s198, 4
          %s208 = int_to_ptr.vmem [resolvable:$true] %s207
          %213 = dma.hbm_to_vmem [thread:$0]  %s206, 4096, %s208, %s195, 64, 64, 4
        $region28: #{tpu_custom_call.1} parent=19 // pred_fallthru
          _
      $region20: #{tpu_custom_call.1} parent=5 // pred_fallthru
        _
      %p214 = scmp.le.s32.totalorder 1, %s16
      %p215 = scmp.lt.s32.totalorder %s16, 3
      %p216 = pnand %p214, %p215
      %p217 = pneg %p216
      // Predicated region
      $region29: #{tpu_custom_call.1} parent=5 // pred_check
        _
      $region30: #{tpu_custom_call.1} parent=5 // pred_check_branch
        %219 = sbr.rel (%p216) target = $region32
      $region31: #{tpu_custom_call.1} parent=5 // pred_region
        %s220 = ssub.s32 %s16, 1
        %s221 = sand.u32 %s50, 1
        %s222 = scalar_lea.sflag [#allocation4], %s221
        %s223 = sand.u32 %s50, 1
        %s224 = smul.addr %s223, 4
        %s225 = scalar_lea.vmem [#allocation3], %s224
        // Predicated region
        $region33: #{tpu_custom_call.1} parent=31 // pred_check
          %p226 = pneg %p63
        $region34: #{tpu_custom_call.1} parent=31 // pred_check_branch
          %228 = sbr.rel (%p226) target = $region36
        $region35: #{tpu_custom_call.1} parent=31 // pred_region
          %230 = dma.done %s222, 64
        $region36: #{tpu_custom_call.1} parent=31 // pred_fallthru
          _
        %s231 = sand.u32 %s78, 1
        %s232 = scalar_lea.sflag [#allocation7], %s231
        %s233 = sand.u32 %s78, 1
        %s234 = smul.addr %s233, 256
        %s235 = scalar_lea.vmem [#allocation6], %s234
        // Predicated region
        $region37: #{tpu_custom_call.1} parent=31 // pred_check
          %p236 = pneg %p91
        $region38: #{tpu_custom_call.1} parent=31 // pred_check_branch
          %238 = sbr.rel (%p236) target = $region40
        $region39: #{tpu_custom_call.1} parent=31 // pred_region
          %240 = dma.done %s232, 4096
        $region40: #{tpu_custom_call.1} parent=31 // pred_fallthru
          _
        %s241 = sand.u32 %s50, 1
        %s242 = scalar_lea.sflag [#allocation4], %s241
        %s243 = sand.u32 %s50, 1
        %s244 = smul.addr %s243, 4
        %s245 = scalar_lea.vmem [#allocation3], %s244
        %p246 = pneg %p63
        %p247 = pneg %p60
        %s248 = sand.u32 %s78, 1
        %s249 = scalar_lea.sflag [#allocation7], %s248
        %s250 = sand.u32 %s78, 1
        %s251 = smul.addr %s250, 256
        %s252 = scalar_lea.vmem [#allocation6], %s251
        %p253 = pneg %p91
        %p254 = pneg %p88
        %p255 = scmp.lt.s32.totalorder %s27, 0
        %s256 = scalar_select %p255, %s27, 0
        %s257 = scalar_lea.vmem %s2, %s256
        %p258 = pneg %p117
        %p259 = pneg %p114
        %p260 = pneg %p145
        %p261 = pneg %p142
        %s262 = smul.u32 4, %s28
        %s263 = smul.u32 64, %s28
        %p264 = scmp.lt.s32.totalorder %s27, 0
        %s265 = scalar_select %p264, %s27, 0
        %s266 = scalar_lea.vmem %s2, %s265
        %p267 = scmp.eq.s32.totalorder %s28, 0
        // Predicated region
        $region41: #{tpu_custom_call.1} parent=31 // pred_check
          %p268 = pneg %p267
        $region42: #{tpu_custom_call.1} parent=31 // pred_check_branch
          %270 = sbr.rel (%p268) target = $region44
        $region43: #{tpu_custom_call.1} parent=31 // pred_region
          %271 = vst [vmem:[#allocation2] sm:$0x3] 0.0
        $region44: #{tpu_custom_call.1} parent=31 // pred_fallthru
          _
        %v272 = vld [vmem:[#allocation2] sm:$0x3]
        %v273 = vld [vmem:[%s225] sm:$0xf]
        %v274 = vld [vmem:[%s235] sm:$0xf]
        %v275 = vld [vmem:[%s235 + $0x4] sm:$0xf]
        %v276 = vld [vmem:[%s235 + $0x8] sm:$0xf]
        %v277 = vld [vmem:[%s235 + $0xc] sm:$0xf]
        %v278 = vld [vmem:[%s235 + $0x10] sm:$0xf]
        %v279 = vld [vmem:[%s235 + $0x14] sm:$0xf]
        %v280 = vld [vmem:[%s235 + $0x18] sm:$0xf]
        %v281 = vld [vmem:[%s235 + $0x1c] sm:$0xf]
        %v282 = vld [vmem:[%s235 + $0x20] sm:$0xf]
        %v283 = vld [vmem:[%s235 + $0x24] sm:$0xf]
        %v284 = vld [vmem:[%s235 + $0x28] sm:$0xf]
        %v285 = vld [vmem:[%s235 + $0x2c] sm:$0xf]
        %v286 = vld [vmem:[%s235 + $0x30] sm:$0xf]
        %v287 = vld [vmem:[%s235 + $0x34] sm:$0xf]
        %v288 = vld [vmem:[%s235 + $0x38] sm:$0xf]
        %v289 = vld [vmem:[%s235 + $0x3c] sm:$0xf]
        %v290 = vld [vmem:[%s235 + $0x40] sm:$0xf]
        %v291 = vld [vmem:[%s235 + $0x44] sm:$0xf]
        %v292 = vld [vmem:[%s235 + $0x48] sm:$0xf]
        %v293 = vld [vmem:[%s235 + $0x4c] sm:$0xf]
        %v294 = vld [vmem:[%s235 + $0x50] sm:$0xf]
        %v295 = vld [vmem:[%s235 + $0x54] sm:$0xf]
        %v296 = vld [vmem:[%s235 + $0x58] sm:$0xf]
        %v297 = vld [vmem:[%s235 + $0x5c] sm:$0xf]
        %v298 = vld [vmem:[%s235 + $0x60] sm:$0xf]
        %v299 = vld [vmem:[%s235 + $0x64] sm:$0xf]
        %v300 = vld [vmem:[%s235 + $0x68] sm:$0xf]
        %v301 = vld [vmem:[%s235 + $0x6c] sm:$0xf]
        %v302 = vld [vmem:[%s235 + $0x70] sm:$0xf]
        %v303 = vld [vmem:[%s235 + $0x74] sm:$0xf]
        %v304 = vld [vmem:[%s235 + $0x78] sm:$0xf]
        %v305 = vld [vmem:[%s235 + $0x7c] sm:$0xf]
        %v306 = vld [vmem:[%s235 + $0x80] sm:$0xf]
        %v307 = vld [vmem:[%s235 + $0x84] sm:$0xf]
        %v308 = vld [vmem:[%s235 + $0x88] sm:$0xf]
        %v309 = vld [vmem:[%s235 + $0x8c] sm:$0xf]
        %v310 = vld [vmem:[%s235 + $0x90] sm:$0xf]
        %v311 = vld [vmem:[%s235 + $0x94] sm:$0xf]
        %v312 = vld [vmem:[%s235 + $0x98] sm:$0xf]
        %v313 = vld [vmem:[%s235 + $0x9c] sm:$0xf]
        %v314 = vld [vmem:[%s235 + $0xa0] sm:$0xf]
        %v315 = vld [vmem:[%s235 + $0xa4] sm:$0xf]
        %v316 = vld [vmem:[%s235 + $0xa8] sm:$0xf]
        %v317 = vld [vmem:[%s235 + $0xac] sm:$0xf]
        %v318 = vld [vmem:[%s235 + $0xb0] sm:$0xf]
        %v319 = vld [vmem:[%s235 + $0xb4] sm:$0xf]
        %v320 = vld [vmem:[%s235 + $0xb8] sm:$0xf]
        %v321 = vld [vmem:[%s235 + $0xbc] sm:$0xf]
        %v322 = vld [vmem:[%s235 + $0xc0] sm:$0xf]
        %v323 = vld [vmem:[%s235 + $0xc4] sm:$0xf]
        %v324 = vld [vmem:[%s235 + $0xc8] sm:$0xf]
        %v325 = vld [vmem:[%s235 + $0xcc] sm:$0xf]
        %v326 = vld [vmem:[%s235 + $0xd0] sm:$0xf]
        %v327 = vld [vmem:[%s235 + $0xd4] sm:$0xf]
        %v328 = vld [vmem:[%s235 + $0xd8] sm:$0xf]
        %v329 = vld [vmem:[%s235 + $0xdc] sm:$0xf]
        %v330 = vld [vmem:[%s235 + $0xe0] sm:$0xf]
        %v331 = vld [vmem:[%s235 + $0xe4] sm:$0xf]
        %v332 = vld [vmem:[%s235 + $0xe8] sm:$0xf]
        %v333 = vld [vmem:[%s235 + $0xec] sm:$0xf]
        %v334 = vld [vmem:[%s235 + $0xf0] sm:$0xf]
        %v335 = vld [vmem:[%s235 + $0xf4] sm:$0xf]
        %v336 = vld [vmem:[%s235 + $0xf8] sm:$0xf]
        %v337 = vld [vmem:[%s235 + $0xfc] sm:$0xf]
        %339 = vst [vmem:[#allocation1] ss:$9 sm:$0xff] %v273
        %v340 = vld [vmem:[#allocation1] sm:$0xff]
        %v341 = vld [vmem:[#allocation1 + $0x9] sm:$0xff]
        %v342 = vld [vmem:[#allocation1 + $0x12] sm:$0xff]
        %v343 = vld [vmem:[#allocation1 + $0x1b] sm:$0xff]
        %v412 = vunpack.c.l.b16 %v274
        %v413 = vunpack.c.l.b16 %v275
        %v414 = vunpack.c.l.b16 %v276
        %v415 = vunpack.c.l.b16 %v277
        %v416 = vunpack.c.l.b16 %v278
        %v417 = vunpack.c.l.b16 %v279
        %v418 = vunpack.c.l.b16 %v280
        %v419 = vunpack.c.l.b16 %v281
        %v420 = vunpack.c.l.b16 %v282
        %v421 = vunpack.c.l.b16 %v283
        %v422 = vunpack.c.l.b16 %v284
        %v423 = vunpack.c.l.b16 %v285
        %v424 = vunpack.c.l.b16 %v286
        %v425 = vunpack.c.l.b16 %v287
        %v426 = vunpack.c.l.b16 %v288
        %v427 = vunpack.c.l.b16 %v289
        %v428 = vunpack.c.l.b16 %v290
        %v429 = vunpack.c.l.b16 %v291
        %v430 = vunpack.c.l.b16 %v292
        %v431 = vunpack.c.l.b16 %v293
        %v432 = vunpack.c.l.b16 %v294
        %v433 = vunpack.c.l.b16 %v295
        %v434 = vunpack.c.l.b16 %v296
        %v435 = vunpack.c.l.b16 %v297
        %v436 = vunpack.c.l.b16 %v298
        %v437 = vunpack.c.l.b16 %v299
        %v438 = vunpack.c.l.b16 %v300
        %v439 = vunpack.c.l.b16 %v301
        %v440 = vunpack.c.l.b16 %v302
        %v441 = vunpack.c.l.b16 %v303
        %v442 = vunpack.c.l.b16 %v304
        %v443 = vunpack.c.l.b16 %v305
        %v444 = vunpack.c.l.b16 %v306
        %v445 = vunpack.c.l.b16 %v307
        %v446 = vunpack.c.l.b16 %v308
        %v447 = vunpack.c.l.b16 %v309
        %v448 = vunpack.c.l.b16 %v310
        %v449 = vunpack.c.l.b16 %v311
        %v450 = vunpack.c.l.b16 %v312
        %v451 = vunpack.c.l.b16 %v313
        %v452 = vunpack.c.l.b16 %v314
        %v453 = vunpack.c.l.b16 %v315
        %v454 = vunpack.c.l.b16 %v316
        %v455 = vunpack.c.l.b16 %v317
        %v456 = vunpack.c.l.b16 %v318
        %v457 = vunpack.c.l.b16 %v319
        %v458 = vunpack.c.l.b16 %v320
        %v459 = vunpack.c.l.b16 %v321
        %v460 = vunpack.c.l.b16 %v322
        %v461 = vunpack.c.l.b16 %v323
        %v462 = vunpack.c.l.b16 %v324
        %v463 = vunpack.c.l.b16 %v325
        %v464 = vunpack.c.l.b16 %v326
        %v465 = vunpack.c.l.b16 %v327
        %v466 = vunpack.c.l.b16 %v328
        %v467 = vunpack.c.l.b16 %v329
        %v468 = vunpack.c.l.b16 %v330
        %v469 = vunpack.c.l.b16 %v331
        %v470 = vunpack.c.l.b16 %v332
        %v471 = vunpack.c.l.b16 %v333
        %v472 = vunpack.c.l.b16 %v334
        %v473 = vunpack.c.l.b16 %v335
        %v474 = vunpack.c.l.b16 %v336
        %v475 = vunpack.c.l.b16 %v337
        %v476 = vpack.c.b16 %v413, %v412
        %v477 = vpack.c.b16 %v415, %v414
        %v478 = vpack.c.b16 %v417, %v416
        %v479 = vpack.c.b16 %v419, %v418
        %v480 = vpack.c.b16 %v421, %v420
        %v481 = vpack.c.b16 %v423, %v422
        %v482 = vpack.c.b16 %v425, %v424
        %v483 = vpack.c.b16 %v427, %v426
        %v484 = vpack.c.b16 %v429, %v428
        %v485 = vpack.c.b16 %v431, %v430
        %v486 = vpack.c.b16 %v433, %v432
        %v487 = vpack.c.b16 %v435, %v434
        %v488 = vpack.c.b16 %v437, %v436
        %v489 = vpack.c.b16 %v439, %v438
        %v490 = vpack.c.b16 %v441, %v440
        %v491 = vpack.c.b16 %v443, %v442
        %v492 = vpack.c.b16 %v445, %v444
        %v493 = vpack.c.b16 %v447, %v446
        %v494 = vpack.c.b16 %v449, %v448
        %v495 = vpack.c.b16 %v451, %v450
        %v496 = vpack.c.b16 %v453, %v452
        %v497 = vpack.c.b16 %v455, %v454
        %v498 = vpack.c.b16 %v457, %v456
        %v499 = vpack.c.b16 %v459, %v458
        %v500 = vpack.c.b16 %v461, %v460
        %v501 = vpack.c.b16 %v463, %v462
        %v502 = vpack.c.b16 %v465, %v464
        %v503 = vpack.c.b16 %v467, %v466
        %v504 = vpack.c.b16 %v469, %v468
        %v505 = vpack.c.b16 %v471, %v470
        %v506 = vpack.c.b16 %v473, %v472
        %v507 = vpack.c.b16 %v475, %v474
        %540 = vmatpush.bf16.msra.mxu0 %v483
        %541 = vmatpush.bf16.msra.mxu0 %v482
        %542 = vmatpush.bf16.msra.mxu0 %v481
        %543 = vmatpush.bf16.msra.mxu0 %v480
        %544 = vmatpush.bf16.msra.mxu0 %v479
        %545 = vmatpush.bf16.msra.mxu0 %v478
        %546 = vmatpush.bf16.msra.mxu0 %v477
        %547 = vmatpush.bf16.msra.mxu0 %v476
        %548 = vmatmul.bf16.gmra.mxu0 %v340
        %v549 = vpop.f32.mrf.mxu0
        %v550 = vadd.f32 0.0, %v549
        %v551 = vpop.f32.mrf.mxu0
        %552 = vdwg.mxu0
        %553 = vmatpush.bf16.msra.mxu0 %v491
        %554 = vmatpush.bf16.msra.mxu0 %v490
        %555 = vmatpush.bf16.msra.mxu0 %v489
        %556 = vmatpush.bf16.msra.mxu0 %v488
        %557 = vmatpush.bf16.msra.mxu0 %v487
        %558 = vmatpush.bf16.msra.mxu0 %v486
        %559 = vmatpush.bf16.msra.mxu0 %v485
        %560 = vmatpush.bf16.msra.mxu0 %v484
        %561 = vmatmul.bf16.gmra.mxu0 %v341
        %v562 = vpop.f32.mrf.mxu0
        %v563 = vadd.f32 %v550, %v562
        %v564 = vpop.f32.mrf.mxu0
        %565 = vdwg.mxu0
        %566 = vmatpush.bf16.msra.mxu0 %v499
        %567 = vmatpush.bf16.msra.mxu0 %v498
        %568 = vmatpush.bf16.msra.mxu0 %v497
        %569 = vmatpush.bf16.msra.mxu0 %v496
        %570 = vmatpush.bf16.msra.mxu0 %v495
        %571 = vmatpush.bf16.msra.mxu0 %v494
        %572 = vmatpush.bf16.msra.mxu0 %v493
        %573 = vmatpush.bf16.msra.mxu0 %v492
        %574 = vmatmul.bf16.gmra.mxu0 %v342
        %v575 = vpop.f32.mrf.mxu0
        %v576 = vadd.f32 %v563, %v575
        %v577 = vpop.f32.mrf.mxu0
        %578 = vdwg.mxu0
        %579 = vmatpush.bf16.msra.mxu0 %v507
        %580 = vmatpush.bf16.msra.mxu0 %v506
        %581 = vmatpush.bf16.msra.mxu0 %v505
        %582 = vmatpush.bf16.msra.mxu0 %v504
        %583 = vmatpush.bf16.msra.mxu0 %v503
        %584 = vmatpush.bf16.msra.mxu0 %v502
        %585 = vmatpush.bf16.msra.mxu0 %v501
        %586 = vmatpush.bf16.msra.mxu0 %v500
        %587 = vmatmul.bf16.gmra.mxu0 %v343
        %v588 = vpop.f32.mrf.mxu0
        %v589 = vadd.f32 %v576, %v588
        %v590 = vpop.f32.mrf.mxu0
        %591 = vdwg.mxu0
        %v592 = vadd.f32 %v272, %v589
        %593 = vst [vmem:[#allocation2] sm:$0x3] %v592
        %p594 = scmp.eq.s32.totalorder %s28, 1
        // Predicated region
        $region45: #{tpu_custom_call.1} parent=31 // pred_check
          %p595 = pneg %p594
        $region46: #{tpu_custom_call.1} parent=31 // pred_check_branch
          %597 = sbr.rel (%p595) target = $region48
        $region47: #{tpu_custom_call.1} parent=31 // pred_region
          %v598 = vld [vmem:[#allocation2] sm:$0x3]
          %v599 = vld [vmem:[%s266] sm:$0x1]
          %v601 = vperm.slane %v599, 0
          %v603 = vadd.f32 %v598, %v601
          %604 = vst [vmem:[#allocation8] sm:$0x3] %v603
        $region48: #{tpu_custom_call.1} parent=31 // pred_fallthru
          _
        // Predicated region
        $region49: #{tpu_custom_call.1} parent=31 // pred_check
          %p605 = pneg %p142
        $region50: #{tpu_custom_call.1} parent=31 // pred_check_branch
          %607 = sbr.rel (%p605) target = $region52
        $region51: #{tpu_custom_call.1} parent=31 // pred_region
          %609 = vsyncadd [#allocation5], 0
          %s610 = sadd.s32 %s27, %s26
          %s611 = smul.addr %s610, 2
          %s612 = scalar_lea.hbm %s3, %s611
          %s614 = sshll.u32 [#allocation8], 4
          %s615 = int_to_ptr.vmem [resolvable:$true] %s614
          %s616 = sshll.u32 %s612, 4
          %s617 = int_to_ptr.hbm [resolvable:$true] %s616
          %619 = dma.vmem_to_hbm [thread:$0]  %s615, 32, %s617, [#allocation5]
        $region52: #{tpu_custom_call.1} parent=31 // pred_fallthru
          _
        // Predicated region
        $region53: #{tpu_custom_call.1} parent=31 // pred_check
          %p620 = pneg %p142
        $region54: #{tpu_custom_call.1} parent=31 // pred_check_branch
          %622 = sbr.rel (%p620) target = $region56
        $region55: #{tpu_custom_call.1} parent=31 // pred_region
          %624 = dma.done [#allocation5], 32
        $region56: #{tpu_custom_call.1} parent=31 // pred_fallthru
          _
      $region32: #{tpu_custom_call.1} parent=5 // pred_fallthru
        _
      %p625 = scmp.le.s32.totalorder 2, %s16
      // Predicated region
      $region57: #{tpu_custom_call.1} parent=5 // pred_check
        %p626 = pneg %p625
      $region58: #{tpu_custom_call.1} parent=5 // pred_check_branch
        %628 = sbr.rel (%p626) target = $region60
      $region59: #{tpu_custom_call.1} parent=5 // pred_region
        %s629 = ssub.s32 %s16, 2
      $region60: #{tpu_custom_call.1} parent=5 // pred_fallthru
        _
    $region6: #{tpu_custom_call.1} parent=1 // loop_footer
      %s20 = sadd.s32 1, %s16
    $region7: #{tpu_custom_call.1} parent=1 // loop_footer_branch
      %15 = sbr.rel target = $region3
    $region8: #{tpu_custom_call.1} parent=1 // loop_exit
      _
    %630 = vsyncpa [#allocation4], 1
    %s631 = scalar_lea.sflag [#allocation4], 1
    %632 = vsyncpa %s631, 1
    %633 = vsyncpa [#allocation7], 1
    %s634 = scalar_lea.sflag [#allocation7], 1
    %635 = vsyncpa %s634, 1
    %636 = vsyncpa [#allocation5], 1
    %s637 = scalar_lea.sflag [#allocation5], 1
    %638 = vsyncpa %s637, 1

</llo_original>
